<compile_context>
chip_gen: v5e
topology: v5e:2x2
jax: 0.10.0
libtpu: 0.0.40
codegen_flags: <defaults>
</compile_context>

<pallas_src>
import math
from functools import partial

import jax
import jax.numpy as jnp
from jax.experimental import pallas as pl
from jax.experimental.pallas import tpu as pltpu


def _self_attention_kernel(heads, head_dim, scale,
                           mask_ref, v_ref, k_ref, q_ref,
                           wv_ref, wk_ref, wq_ref, wfc_ref, bfc_ref,
                           out_ref):
    """One batch-tile per grid step.

    Q/K/V projections are single full-width (rows, E) @ (E, E) MXU matmuls against
    block-diagonal, pre-transposed weights built once in the wrapper (the 1/sqrt(E)
    scale is folded into the Q weight).  Only the inherently per-head score/context
    matmuls remain in a small static loop, and fc_out is accumulated per head so no
    lane-axis concatenate (and no in-kernel weight transpose) is needed.
    """
    B, q_len, E = q_ref.shape
    k_len = k_ref.shape[1]
    D = head_dim

    q2 = q_ref[...].reshape(B * q_len, E)
    k2 = k_ref[...].reshape(B * k_len, E)
    v2 = v_ref[...].reshape(B * k_len, E)

    # Fused projections: one matmul each instead of `heads` tiny (D x D) matmuls.
    qp = jnp.dot(q2, wq_ref[...], preferred_element_type=jnp.float32).reshape(B, q_len, E)
    kp = jnp.dot(k2, wk_ref[...], preferred_element_type=jnp.float32).reshape(B, k_len, E)
    vp = jnp.dot(v2, wv_ref[...], preferred_element_type=jnp.float32).reshape(B, k_len, E)

    keep = mask_ref[...]                       # (B, q_len, k_len) f32: 1.0 keep, 0.0 masked
    neg = jnp.float32(-1e20 * scale)           # masked_fill value after the /sqrt(E) divide

    acc = jnp.zeros((B * q_len, E), dtype=jnp.float32)
    for h in range(heads):                     # static; only per-head score/context matmuls remain
        sl = slice(h * D, (h + 1) * D)
        qh = qp[:, :, sl]                      # (B, q_len, D)
        kh = kp[:, :, sl]                      # (B, k_len, D)
        vh = vp[:, :, sl]                      # (B, k_len, D)

        # scale is already folded into the Q projection weight.
        energy = jnp.einsum('bqd,bkd->bqk', qh, kh,
                            preferred_element_type=jnp.float32)   # (B, q_len, k_len)
        energy = jnp.where(keep == 0.0, neg, energy)

        # Softmax kept in f32 (mandatory on v5e; cheap everywhere).
        m = jnp.max(energy, axis=-1, keepdims=True)
        e = jnp.exp(energy - m)
        # approx=True would move the divide to the EUP slot but costs ~1e-4 relative error;
        # keep exact reciprocal so the reference tolerance (1e-4) is guaranteed.
        attn = e * pl.reciprocal(jnp.sum(e, axis=-1, keepdims=True), approx=False)

        ctx = jnp.einsum('bqk,bkd->bqd', attn, vh,
                         preferred_element_type=jnp.float32)       # (B, q_len, D)
        # fc_out accumulated per head: no jnp.concatenate along the lane axis.
        acc = acc + jnp.dot(ctx.reshape(B * q_len, D), wfc_ref[sl, :],
                            preferred_element_type=jnp.float32)

    out = acc + bfc_ref[...]
    out_ref[...] = out.reshape(B, q_len, E).astype(out_ref.dtype)


def self_attention_pallas(values, keys, queries, mask, params, *, heads, block_batch=None):
    N, q_len, E = queries.shape
    k_len = keys.shape[1]
    v_len = values.shape[1]
    assert v_len == k_len, "value_len must equal key_len (required by the module's einsums)"
    D = E // heads
    wv, wk, wq, wfc, bfc = params
    scale = 1.0 / math.sqrt(E)                 # module uses 1/sqrt(embed_size), not 1/sqrt(head_dim)

    # One-time weight prep hoisted out of the kernel:
    #  - block-diagonal so per-head projections become a single full-width matmul,
    #  - pre-transposed so no .T appears inside the kernel,
    #  - softmax scale folded into the Q weight.
    eye = jnp.eye(heads, dtype=wq.dtype)
    wq_bd = jnp.kron(eye, (wq * scale).T)      # (E, E)
    wk_bd = jnp.kron(eye, wk.T)                # (E, E)
    wv_bd = jnp.kron(eye, wv.T)                # (E, E)
    wfc_t = wfc.T                              # (E, E)
    bfc2 = bfc.reshape(1, E)
    # Compact f32 keep-mask with the broadcast head dim squeezed in the wrapper.
    keep = (mask[:, 0] != 0).astype(jnp.float32)   # (N, q_len, k_len)

    # Pack several batch elements per (sequential) grid step so the matmul M-dim and the
    # store path see >=128 rows when possible; keep it a divisor of N (no padded blocks).
    if block_batch is None:
        target = max(1, pl.cdiv(128, q_len))
        block_batch = 1
        for b in range(1, N + 1):
            if N % b == 0 and b <= target:
                block_batch = b
    B_tile = block_batch
    assert N % B_tile == 0
    grid = (N // B_tile,)

    # Explicit scoped-VMEM limit sized from the chosen tiles, with headroom.
    itemsize = 4
    blk_bytes = (2 * B_tile * q_len * E          # queries + output blocks
                 + 2 * B_tile * k_len * E        # keys + values blocks
                 + B_tile * q_len * k_len) * itemsize   # keep-mask block
    w_bytes = (4 * E * E + E) * itemsize
    est = 2 * (blk_bytes + w_bytes)              # double-buffered pipeline
    vmem_limit = int(min(max(4 * est, 32 << 20), 64 << 20))

    kernel = partial(_self_attention_kernel, heads, D, scale)
    out = pl.pallas_call(
        kernel,
        out_shape=jax.ShapeDtypeStruct((N, q_len, E), queries.dtype),
        grid=grid,
        in_specs=[
            pl.BlockSpec((B_tile, q_len, k_len), lambda n: (n, 0, 0)),   # keep-mask
            pl.BlockSpec((B_tile, k_len, E), lambda n: (n, 0, 0)),       # values
            pl.BlockSpec((B_tile, k_len, E), lambda n: (n, 0, 0)),       # keys
            pl.BlockSpec((B_tile, q_len, E), lambda n: (n, 0, 0)),       # queries
            pl.BlockSpec((E, E), lambda n: (0, 0)),                      # W_v  (block-diag, pre-T)
            pl.BlockSpec((E, E), lambda n: (0, 0)),                      # W_k  (block-diag, pre-T)
            pl.BlockSpec((E, E), lambda n: (0, 0)),                      # W_q  (block-diag, pre-T, scaled)
            pl.BlockSpec((E, E), lambda n: (0, 0)),                      # W_fc (pre-T)
            pl.BlockSpec((1, E), lambda n: (0, 0)),                      # b_fc
        ],
        out_specs=pl.BlockSpec((B_tile, q_len, E), lambda n: (n, 0, 0)),
        compiler_params=pltpu.CompilerParams(
            dimension_semantics=("parallel",),
            vmem_limit_bytes=vmem_limit,
        ),
    )(keep, values, keys, queries, wv_bd, wk_bd, wq_bd, wfc_t, bfc2)
    # TODO(synk): for multi-K sequence lengths, tile k_len with an online-softmax (flash) inner
    # loop and add a q-tile grid axis so both v7x TensorCores get work at small batch sizes;
    # on v6e/v7x the MXU operands can additionally be cast to bf16 (f32 accumulation).
    return out


def self_attention_ref(values, keys, queries, mask, params, *, heads):
    """Pure-JAX reference reproducing the PyTorch forward exactly."""
    N, q_len, E = queries.shape
    D = E // heads
    wv, wk, wq, wfc, bfc = params
    v = values.reshape(N, -1, heads, D) @ wv.T
    k = keys.reshape(N, -1, heads, D) @ wk.T
    q = queries.reshape(N, -1, heads, D) @ wq.T
    energy = jnp.einsum('nqhd,nkhd->nhqk', q, k)
    energy = jnp.where(mask == 0, jnp.float32(-1e20), energy)
    attn = jax.nn.softmax(energy / math.sqrt(E), axis=3)
    out = jnp.einsum('nhql,nlhd->nqhd', attn, v).reshape(N, q_len, E)
    return out @ wfc.T + bfc


if __name__ == "__main__":
    N, seq, E, heads = 2, 8, 32, 2
    D = E // heads

    key = jax.random.PRNGKey(0)
    kv, kk, kq, kwv, kwk, kwq, kwfc, kbfc, kmask = jax.random.split(key, 9)

    values = jax.random.normal(kv, (N, seq, E), dtype=jnp.float32)
    keys_in = jax.random.normal(kk, (N, seq, E), dtype=jnp.float32)
    queries = jax.random.normal(kq, (N, seq, E), dtype=jnp.float32)

    # Deterministic parameters (shapes from nn.Linear in __init__).
    wv = jax.random.normal(kwv, (D, D), dtype=jnp.float32) * 0.1
    wk = jax.random.normal(kwk, (D, D), dtype=jnp.float32) * 0.1
    wq = jax.random.normal(kwq, (D, D), dtype=jnp.float32) * 0.1
    wfc = jax.random.normal(kwfc, (E, E), dtype=jnp.float32) * 0.1
    bfc = jax.random.normal(kbfc, (E,), dtype=jnp.float32) * 0.1
    params = (wv, wk, wq, wfc, bfc)

    # Causal mask, broadcast over heads like the PyTorch masked_fill.
    causal = jnp.tril(jnp.ones((seq, seq), dtype=jnp.int32))
    mask = jnp.broadcast_to(causal[None, None], (N, 1, seq, seq))

    out = self_attention_pallas(values, keys_in, queries, mask, params, heads=heads)
    out = jax.block_until_ready(out)

    ref = self_attention_ref(values, keys_in, queries, mask, params, heads=heads)
    assert out.shape == (N, seq, E)
    assert jnp.allclose(out, ref, atol=1e-4, rtol=1e-4), "mismatch vs reference"

    print("KERNEL_OK")
</pallas_src>

<mosaic_0001>
module attributes {stable_mosaic.version = 11 : i64} {
  func.func @_self_attention_kernel(%arg0: i32, %arg1: memref<2x8x8xf32, #tpu.memory_space<vmem>>, %arg2: memref<2x8x32xf32, #tpu.memory_space<vmem>>, %arg3: memref<2x8x32xf32, #tpu.memory_space<vmem>>, %arg4: memref<2x8x32xf32, #tpu.memory_space<vmem>>, %arg5: memref<32x32xf32, #tpu.memory_space<vmem>>, %arg6: memref<32x32xf32, #tpu.memory_space<vmem>>, %arg7: memref<32x32xf32, #tpu.memory_space<vmem>>, %arg8: memref<32x32xf32, #tpu.memory_space<vmem>>, %arg9: memref<1x32xf32, #tpu.memory_space<vmem>>, %arg10: memref<2x8x32xf32, #tpu.memory_space<vmem>>) attributes {dimension_semantics = [#tpu.dimension_semantics<parallel>], iteration_bounds = array<i64: 1>, scalar_prefetch = 0 : i64, scratch_operands = 0 : i64, tpu.core_type = #tpu.core_type<tc>, window_params = [{transform_indices = @transform_0, window_bounds = array<i64: 2, 8, 8>}, {transform_indices = @transform_1, window_bounds = array<i64: 2, 8, 32>}, {transform_indices = @transform_2, window_bounds = array<i64: 2, 8, 32>}, {transform_indices = @transform_3, window_bounds = array<i64: 2, 8, 32>}, {pipeline_mode = #tpu.pipeline_mode<synchronous>, transform_indices = @transform_4, window_bounds = array<i64: 32, 32>}, {pipeline_mode = #tpu.pipeline_mode<synchronous>, transform_indices = @transform_5, window_bounds = array<i64: 32, 32>}, {pipeline_mode = #tpu.pipeline_mode<synchronous>, transform_indices = @transform_6, window_bounds = array<i64: 32, 32>}, {pipeline_mode = #tpu.pipeline_mode<synchronous>, transform_indices = @transform_7, window_bounds = array<i64: 32, 32>}, {pipeline_mode = #tpu.pipeline_mode<synchronous>, transform_indices = @transform_8, window_bounds = array<i64: 1, 32>}, {transform_indices = @transform_9, window_bounds = array<i64: 2, 8, 32>}]} {
    %c0 = arith.constant 0 : index
    %c0_0 = arith.constant 0 : index
    %c0_1 = arith.constant 0 : index
    %0 = vector.load %arg4[%c0, %c0_0, %c0_1] : memref<2x8x32xf32, #tpu.memory_space<vmem>>, vector<2x8x32xf32>
    %1 = vector.shape_cast %0 : vector<2x8x32xf32> to vector<16x32xf32>
    %c0_2 = arith.constant 0 : index
    %c0_3 = arith.constant 0 : index
    %c0_4 = arith.constant 0 : index
    %2 = vector.load %arg3[%c0_2, %c0_3, %c0_4] : memref<2x8x32xf32, #tpu.memory_space<vmem>>, vector<2x8x32xf32>
    %3 = vector.shape_cast %2 : vector<2x8x32xf32> to vector<16x32xf32>
    %c0_5 = arith.constant 0 : index
    %c0_6 = arith.constant 0 : index
    %c0_7 = arith.constant 0 : index
    %4 = vector.load %arg2[%c0_5, %c0_6, %c0_7] : memref<2x8x32xf32, #tpu.memory_space<vmem>>, vector<2x8x32xf32>
    %5 = vector.shape_cast %4 : vector<2x8x32xf32> to vector<16x32xf32>
    %c0_8 = arith.constant 0 : index
    %c0_9 = arith.constant 0 : index
    %6 = vector.load %arg7[%c0_8, %c0_9] : memref<32x32xf32, #tpu.memory_space<vmem>>, vector<32x32xf32>
    %cst = arith.constant dense<0.000000e+00> : vector<16x32xf32>
    %7 = tpu.matmul %1, %6, %cst {dimension_numbers = #tpu.dot_dimension_numbers<[1], [0], [0], [1], [0, 0, 1, 1], [], []>} : vector<16x32xf32>, vector<32x32xf32>, vector<16x32xf32> -> vector<16x32xf32>
    %8 = vector.shape_cast %7 : vector<16x32xf32> to vector<2x8x32xf32>
    %c0_10 = arith.constant 0 : index
    %c0_11 = arith.constant 0 : index
    %9 = vector.load %arg6[%c0_10, %c0_11] : memref<32x32xf32, #tpu.memory_space<vmem>>, vector<32x32xf32>
    %cst_12 = arith.constant dense<0.000000e+00> : vector<16x32xf32>
    %10 = tpu.matmul %3, %9, %cst_12 {dimension_numbers = #tpu.dot_dimension_numbers<[1], [0], [0], [1], [0, 0, 1, 1], [], []>} : vector<16x32xf32>, vector<32x32xf32>, vector<16x32xf32> -> vector<16x32xf32>
    %11 = vector.shape_cast %10 : vector<16x32xf32> to vector<2x8x32xf32>
    %c0_13 = arith.constant 0 : index
    %c0_14 = arith.constant 0 : index
    %12 = vector.load %arg5[%c0_13, %c0_14] : memref<32x32xf32, #tpu.memory_space<vmem>>, vector<32x32xf32>
    %cst_15 = arith.constant dense<0.000000e+00> : vector<16x32xf32>
    %13 = tpu.matmul %5, %12, %cst_15 {dimension_numbers = #tpu.dot_dimension_numbers<[1], [0], [0], [1], [0, 0, 1, 1], [], []>} : vector<16x32xf32>, vector<32x32xf32>, vector<16x32xf32> -> vector<16x32xf32>
    %14 = vector.shape_cast %13 : vector<16x32xf32> to vector<2x8x32xf32>
    %c0_16 = arith.constant 0 : index
    %c0_17 = arith.constant 0 : index
    %c0_18 = arith.constant 0 : index
    %15 = vector.load %arg1[%c0_16, %c0_17, %c0_18] : memref<2x8x8xf32, #tpu.memory_space<vmem>>, vector<2x8x8xf32>
    %cst_19 = arith.constant 0.000000e+00 : f32
    %16 = vector.broadcast %cst_19 : f32 to vector<16x32xf32>
    %17 = vector.extract_strided_slice %8 {offsets = [0, 0, 0], sizes = [2, 8, 16], strides = [1, 1, 1]} : vector<2x8x32xf32> to vector<2x8x16xf32>
    %18 = vector.extract_strided_slice %11 {offsets = [0, 0, 0], sizes = [2, 8, 16], strides = [1, 1, 1]} : vector<2x8x32xf32> to vector<2x8x16xf32>
    %19 = vector.extract_strided_slice %14 {offsets = [0, 0, 0], sizes = [2, 8, 16], strides = [1, 1, 1]} : vector<2x8x32xf32> to vector<2x8x16xf32>
    "tpu.trace_start"() <{level = 10 : i32, message = "bqd,bkd->bqk"}> : () -> ()
    %cst_20 = arith.constant dense<0.000000e+00> : vector<2x8x8xf32>
    %20 = tpu.matmul %17, %18, %cst_20 {dimension_numbers = #tpu.dot_dimension_numbers<[2], [2], [1], [1], [0, 0, 0, 1, 1, 1], [0], [0]>} : vector<2x8x16xf32>, vector<2x8x16xf32>, vector<2x8x8xf32> -> vector<2x8x8xf32>
    %cst_21 = arith.constant 0.000000e+00 : f32
    "tpu.trace_stop"() : () -> ()
    %21 = vector.broadcast %cst_21 : f32 to vector<2x8x8xf32>
    %22 = arith.cmpf oeq, %15, %21 : vector<2x8x8xf32>
    %cst_22 = arith.constant -1.76776698E+19 : f32
    %23 = vector.broadcast %cst_22 : f32 to vector<2x8x8xf32>
    %24 = arith.select %22, %23, %20 : vector<2x8x8xi1>, vector<2x8x8xf32>
    %cst_23 = arith.constant dense<0xFF800000> : vector<2x8xf32>
    %25 = vector.multi_reduction <maximumf>, %24, %cst_23 [2] : vector<2x8x8xf32> to vector<2x8xf32>
    %26 = vector.shape_cast %25 : vector<2x8xf32> to vector<2x8x1xf32>
    %27 = vector.broadcast %26 : vector<2x8x1xf32> to vector<2x8x8xf32>
    %28 = arith.subf %24, %27 : vector<2x8x8xf32>
    %29 = math.exp %28 : vector<2x8x8xf32>
    %cst_24 = arith.constant dense<0.000000e+00> : vector<2x8xf32>
    %30 = vector.multi_reduction <add>, %29, %cst_24 [2] : vector<2x8x8xf32> to vector<2x8xf32>
    %31 = vector.shape_cast %30 : vector<2x8xf32> to vector<2x8x1xf32>
    %32 = tpu.reciprocal %31 : vector<2x8x1xf32> -> vector<2x8x1xf32>
    %33 = vector.broadcast %32 : vector<2x8x1xf32> to vector<2x8x8xf32>
    %34 = arith.mulf %29, %33 : vector<2x8x8xf32>
    "tpu.trace_start"() <{level = 10 : i32, message = "bqk,bkd->bqd"}> : () -> ()
    %cst_25 = arith.constant dense<0.000000e+00> : vector<2x8x16xf32>
    %35 = tpu.matmul %34, %19, %cst_25 {dimension_numbers = #tpu.dot_dimension_numbers<[2], [1], [1], [2], [0, 0, 0, 1, 1, 2], [0], [0]>} : vector<2x8x8xf32>, vector<2x8x16xf32>, vector<2x8x16xf32> -> vector<2x8x16xf32>
    "tpu.trace_stop"() : () -> ()
    %36 = vector.shape_cast %35 : vector<2x8x16xf32> to vector<16x16xf32>
    %c0_26 = arith.constant 0 : index
    %c0_27 = arith.constant 0 : index
    %37 = vector.load %arg8[%c0_26, %c0_27] : memref<32x32xf32, #tpu.memory_space<vmem>>, vector<16x32xf32>
    %cst_28 = arith.constant dense<0.000000e+00> : vector<16x32xf32>
    %38 = tpu.matmul %36, %37, %cst_28 {dimension_numbers = #tpu.dot_dimension_numbers<[1], [0], [0], [1], [0, 0, 1, 1], [], []>} : vector<16x16xf32>, vector<16x32xf32>, vector<16x32xf32> -> vector<16x32xf32>
    %39 = arith.addf %16, %38 : vector<16x32xf32>
    %40 = vector.extract_strided_slice %8 {offsets = [0, 0, 16], sizes = [2, 8, 16], strides = [1, 1, 1]} : vector<2x8x32xf32> to vector<2x8x16xf32>
    %41 = vector.extract_strided_slice %11 {offsets = [0, 0, 16], sizes = [2, 8, 16], strides = [1, 1, 1]} : vector<2x8x32xf32> to vector<2x8x16xf32>
    %42 = vector.extract_strided_slice %14 {offsets = [0, 0, 16], sizes = [2, 8, 16], strides = [1, 1, 1]} : vector<2x8x32xf32> to vector<2x8x16xf32>
    "tpu.trace_start"() <{level = 10 : i32, message = "bqd,bkd->bqk"}> : () -> ()
    %cst_29 = arith.constant dense<0.000000e+00> : vector<2x8x8xf32>
    %43 = tpu.matmul %40, %41, %cst_29 {dimension_numbers = #tpu.dot_dimension_numbers<[2], [2], [1], [1], [0, 0, 0, 1, 1, 1], [0], [0]>} : vector<2x8x16xf32>, vector<2x8x16xf32>, vector<2x8x8xf32> -> vector<2x8x8xf32>
    %cst_30 = arith.constant 0.000000e+00 : f32
    "tpu.trace_stop"() : () -> ()
    %44 = vector.broadcast %cst_30 : f32 to vector<2x8x8xf32>
    %45 = arith.cmpf oeq, %15, %44 : vector<2x8x8xf32>
    %cst_31 = arith.constant -1.76776698E+19 : f32
    %46 = vector.broadcast %cst_31 : f32 to vector<2x8x8xf32>
    %47 = arith.select %45, %46, %43 : vector<2x8x8xi1>, vector<2x8x8xf32>
    %cst_32 = arith.constant dense<0xFF800000> : vector<2x8xf32>
    %48 = vector.multi_reduction <maximumf>, %47, %cst_32 [2] : vector<2x8x8xf32> to vector<2x8xf32>
    %49 = vector.shape_cast %48 : vector<2x8xf32> to vector<2x8x1xf32>
    %50 = vector.broadcast %49 : vector<2x8x1xf32> to vector<2x8x8xf32>
    %51 = arith.subf %47, %50 : vector<2x8x8xf32>
    %52 = math.exp %51 : vector<2x8x8xf32>
    %cst_33 = arith.constant dense<0.000000e+00> : vector<2x8xf32>
    %53 = vector.multi_reduction <add>, %52, %cst_33 [2] : vector<2x8x8xf32> to vector<2x8xf32>
    %54 = vector.shape_cast %53 : vector<2x8xf32> to vector<2x8x1xf32>
    %55 = tpu.reciprocal %54 : vector<2x8x1xf32> -> vector<2x8x1xf32>
    %56 = vector.broadcast %55 : vector<2x8x1xf32> to vector<2x8x8xf32>
    %57 = arith.mulf %52, %56 : vector<2x8x8xf32>
    "tpu.trace_start"() <{level = 10 : i32, message = "bqk,bkd->bqd"}> : () -> ()
    %cst_34 = arith.constant dense<0.000000e+00> : vector<2x8x16xf32>
    %58 = tpu.matmul %57, %42, %cst_34 {dimension_numbers = #tpu.dot_dimension_numbers<[2], [1], [1], [2], [0, 0, 0, 1, 1, 2], [0], [0]>} : vector<2x8x8xf32>, vector<2x8x16xf32>, vector<2x8x16xf32> -> vector<2x8x16xf32>
    "tpu.trace_stop"() : () -> ()
    %59 = vector.shape_cast %58 : vector<2x8x16xf32> to vector<16x16xf32>
    %c16 = arith.constant 16 : index
    %c0_35 = arith.constant 0 : index
    %60 = vector.load %arg8[%c16, %c0_35] : memref<32x32xf32, #tpu.memory_space<vmem>>, vector<16x32xf32>
    %cst_36 = arith.constant dense<0.000000e+00> : vector<16x32xf32>
    %61 = tpu.matmul %59, %60, %cst_36 {dimension_numbers = #tpu.dot_dimension_numbers<[1], [0], [0], [1], [0, 0, 1, 1], [], []>} : vector<16x16xf32>, vector<16x32xf32>, vector<16x32xf32> -> vector<16x32xf32>
    %62 = arith.addf %39, %61 : vector<16x32xf32>
    %c0_37 = arith.constant 0 : index
    %c0_38 = arith.constant 0 : index
    %63 = vector.load %arg9[%c0_37, %c0_38] : memref<1x32xf32, #tpu.memory_space<vmem>>, vector<1x32xf32>
    %64 = vector.broadcast %63 : vector<1x32xf32> to vector<16x32xf32>
    %65 = arith.addf %62, %64 : vector<16x32xf32>
    %66 = vector.shape_cast %65 : vector<16x32xf32> to vector<2x8x32xf32>
    %c0_39 = arith.constant 0 : index
    %c0_40 = arith.constant 0 : index
    %c0_41 = arith.constant 0 : index
    %67 = vector.load %arg10[%c0_39, %c0_40, %c0_41] : memref<2x8x32xf32, #tpu.memory_space<vmem>>, vector<2x8x32xf32>
    tpu.vector_store %arg10[%c0_39, %c0_40, %c0_41], %66 {strides = array<i32>} : memref<2x8x32xf32, #tpu.memory_space<vmem>>, vector<2x8x32xf32>,
    return
  }
  func.func @transform_0(%arg0: i32) -> (i32, i32, i32) {
    %c0_i32 = arith.constant 0 : i32
    %c0_i32_0 = arith.constant 0 : i32
    %c0_i32_1 = arith.constant 0 : i32
    return %arg0, %c0_i32, %c0_i32_0 : i32, i32, i32
  }
  func.func @transform_1(%arg0: i32) -> (i32, i32, i32) {
    %c0_i32 = arith.constant 0 : i32
    %c0_i32_0 = arith.constant 0 : i32
    %c0_i32_1 = arith.constant 0 : i32
    return %arg0, %c0_i32, %c0_i32_0 : i32, i32, i32
  }
  func.func @transform_2(%arg0: i32) -> (i32, i32, i32) {
    %c0_i32 = arith.constant 0 : i32
    %c0_i32_0 = arith.constant 0 : i32
    %c0_i32_1 = arith.constant 0 : i32
    return %arg0, %c0_i32, %c0_i32_0 : i32, i32, i32
  }
  func.func @transform_3(%arg0: i32) -> (i32, i32, i32) {
    %c0_i32 = arith.constant 0 : i32
    %c0_i32_0 = arith.constant 0 : i32
    %c0_i32_1 = arith.constant 0 : i32
    return %arg0, %c0_i32, %c0_i32_0 : i32, i32, i32
  }
  func.func @transform_4(%arg0: i32) -> (i32, i32) {
    %c0_i32 = arith.constant 0 : i32
    %c0_i32_0 = arith.constant 0 : i32
    %c0_i32_1 = arith.constant 0 : i32
    return %c0_i32, %c0_i32_0 : i32, i32
  }
  func.func @transform_5(%arg0: i32) -> (i32, i32) {
    %c0_i32 = arith.constant 0 : i32
    %c0_i32_0 = arith.constant 0 : i32
    %c0_i32_1 = arith.constant 0 : i32
    return %c0_i32, %c0_i32_0 : i32, i32
  }
  func.func @transform_6(%arg0: i32) -> (i32, i32) {
    %c0_i32 = arith.constant 0 : i32
    %c0_i32_0 = arith.constant 0 : i32
    %c0_i32_1 = arith.constant 0 : i32
    return %c0_i32, %c0_i32_0 : i32, i32
  }
  func.func @transform_7(%arg0: i32) -> (i32, i32) {
    %c0_i32 = arith.constant 0 : i32
    %c0_i32_0 = arith.constant 0 : i32
    %c0_i32_1 = arith.constant 0 : i32
    return %c0_i32, %c0_i32_0 : i32, i32
  }
  func.func @transform_8(%arg0: i32) -> (i32, i32) {
    %c0_i32 = arith.constant 0 : i32
    %c0_i32_0 = arith.constant 0 : i32
    %c0_i32_1 = arith.constant 0 : i32
    return %c0_i32, %c0_i32_0 : i32, i32
  }
  func.func @transform_9(%arg0: i32) -> (i32, i32, i32) {
    %c0_i32 = arith.constant 0 : i32
    %c0_i32_0 = arith.constant 0 : i32
    %c0_i32_1 = arith.constant 0 : i32
    return %arg0, %c0_i32, %c0_i32_0 : i32, i32, i32
  }
}

</mosaic_0001>

<llo_original>
// kernel: tpu_custom_call.1
$region0: #{tpu_custom_call.1}
  #allocation0 [shape = 'u32[]', space=smem, size = 0x4, offset = 0x4, fixed_abs, tag = 'smem constant byte address 0x4 - core index']
  #allocation1 [shape = 'u32[72,128]{1,0:T(1,128)}', space=vmem, size = 0x9000, scoped, tag = 'internal scratch']
  %s0 = inlined_call_operand.hbm [shape: f32[2,8,8], index: 0, kind: input, shape index: {}]
  %s1 = inlined_call_operand.hbm [shape: f32[2,8,32], index: 1, kind: input, shape index: {}]
  %s2 = inlined_call_operand.hbm [shape: f32[2,8,32], index: 2, kind: input, shape index: {}]
  %s3 = inlined_call_operand.hbm [shape: f32[2,8,32], index: 3, kind: input, shape index: {}]
  %s4 = inlined_call_operand.hbm [shape: f32[32,32], index: 4, kind: input, shape index: {}]
  %s5 = inlined_call_operand.hbm [shape: f32[32,32], index: 5, kind: input, shape index: {}]
  %s6 = inlined_call_operand.hbm [shape: f32[32,32], index: 6, kind: input, shape index: {}]
  %s7 = inlined_call_operand.hbm [shape: f32[32,32], index: 7, kind: input, shape index: {}]
  %s8 = inlined_call_operand.vmem [shape: f32[1,32], index: 8, kind: input, shape index: {}]
  %s9 = inlined_call_operand.hbm [shape: f32[2,8,32], index: 9, kind: output, shape index: {}]
  %s10 = sld [smem:[#allocation0]]
  $region78: #{tpu_custom_call.1} parent=0
    _
  %s12 = ssub.s32 1, %s10
  %s13 = scalar_select 0, %s12, %s10
  $region1: #{tpu_custom_call.1} parent=0
    #allocation2 [shape = 'u8[8192]{0}', space=vmem, size = 0x2000, scoped, tag = 'input window, operand 0, single buffered']
    #allocation3 [shape = 's32[1]{0}', space=sflag, size = 0x4, scoped, tag = 'scoped memory for tpu_custom_call.1']
    #allocation4 [shape = 's32[1]{0}', space=sflag, size = 0x4, scoped, tag = 'scoped memory for tpu_custom_call.1']
    #allocation5 [shape = 'u8[8192]{0}', space=vmem, size = 0x2000, scoped, tag = 'input window, operand 1, single buffered']
    #allocation6 [shape = 's32[1]{0}', space=sflag, size = 0x4, scoped, tag = 'scoped memory for tpu_custom_call.1']
    #allocation7 [shape = 'u8[8192]{0}', space=vmem, size = 0x2000, scoped, tag = 'input window, operand 2, single buffered']
    #allocation8 [shape = 'u8[8192]{0}', space=vmem, size = 0x2000, scoped, tag = 'input window, operand 3, single buffered']
    #allocation9 [shape = 's32[1]{0}', space=sflag, size = 0x4, scoped, tag = 'scoped memory for tpu_custom_call.1']
    #allocation10 [shape = 'u8[16384]{0}', space=vmem, size = 0x4000, scoped, tag = 'input window, operand 4, single buffered']
    #allocation11 [shape = 'u8[16384]{0}', space=vmem, size = 0x4000, scoped, tag = 'input window, operand 5, single buffered']
    #allocation12 [shape = 's32[1]{0}', space=sflag, size = 0x4, scoped, tag = 'scoped memory for tpu_custom_call.1']
    #allocation13 [shape = 'u8[16384]{0}', space=vmem, size = 0x4000, scoped, tag = 'input window, operand 6, single buffered']
    #allocation14 [shape = 'u8[16384]{0}', space=vmem, size = 0x4000, scoped, tag = 'input window, operand 7, single buffered']
    #allocation15 [shape = 's32[1]{0}', space=sflag, size = 0x4, scoped, tag = 'scoped memory for tpu_custom_call.1']
    #allocation16 [shape = 'u8[8192]{0}', space=vmem, size = 0x2000, scoped, tag = 'output window, operand 0, single buffered']
    %14 = vsyncpa [#allocation3], 0
    %15 = vsyncpa [#allocation6], 0
    %16 = vsyncpa [#allocation9], 0
    %17 = vsyncpa [#allocation12], 0
    %18 = vsyncpa [#allocation15], 0
    %19 = vsyncpa [#allocation4], 0
    // Predicated region
    $region2: #{tpu_custom_call.1} parent=1 // pred_check
      _
    $region3: #{tpu_custom_call.1} parent=1 // pred_check_branch
      %21 = sbr.rel (0) target = $region5
    $region4: #{tpu_custom_call.1} parent=1 // pred_region
      %23 = vsyncadd [#allocation3], 0
      %s24 = sshll.u32 %s0, 4
      %s25 = int_to_ptr.hbm [resolvable:$true] %s24
      %s26 = sshll.u32 [#allocation2], 4
      %s27 = int_to_ptr.vmem [resolvable:$true] %s26
      %32 = dma.hbm_to_vmem [thread:$0]  %s25, 256, %s27, [#allocation3], 128, 128, 8
    $region5: #{tpu_custom_call.1} parent=1 // pred_fallthru
      _
    // Predicated region
    $region6: #{tpu_custom_call.1} parent=1 // pred_check
      _
    $region7: #{tpu_custom_call.1} parent=1 // pred_check_branch
      %34 = sbr.rel (0) target = $region9
    $region8: #{tpu_custom_call.1} parent=1 // pred_region
      %36 = vsyncadd [#allocation6], 0
      %s37 = sshll.u32 %s1, 4
      %s38 = int_to_ptr.hbm [resolvable:$true] %s37
      %s39 = sshll.u32 [#allocation5], 4
      %s40 = int_to_ptr.vmem [resolvable:$true] %s39
      %45 = dma.hbm_to_vmem [thread:$0]  %s38, 256, %s40, [#allocation6], 128, 128, 8
    $region9: #{tpu_custom_call.1} parent=1 // pred_fallthru
      _
    // Predicated region
    $region10: #{tpu_custom_call.1} parent=1 // pred_check
      _
    $region11: #{tpu_custom_call.1} parent=1 // pred_check_branch
      %47 = sbr.rel (0) target = $region13
    $region12: #{tpu_custom_call.1} parent=1 // pred_region
      %49 = vsyncadd [#allocation6], 0
      %s50 = sshll.u32 %s2, 4
      %s51 = int_to_ptr.hbm [resolvable:$true] %s50
      %s52 = sshll.u32 [#allocation7], 4
      %s53 = int_to_ptr.vmem [resolvable:$true] %s52
      %58 = dma.hbm_to_vmem [thread:$0]  %s51, 256, %s53, [#allocation6], 128, 128, 8
    $region13: #{tpu_custom_call.1} parent=1 // pred_fallthru
      _
    // Predicated region
    $region14: #{tpu_custom_call.1} parent=1 // pred_check
      _
    $region15: #{tpu_custom_call.1} parent=1 // pred_check_branch
      %60 = sbr.rel (0) target = $region17
    $region16: #{tpu_custom_call.1} parent=1 // pred_region
      %62 = vsyncadd [#allocation9], 0
      %s63 = sshll.u32 %s3, 4
      %s64 = int_to_ptr.hbm [resolvable:$true] %s63
      %s65 = sshll.u32 [#allocation8], 4
      %s66 = int_to_ptr.vmem [resolvable:$true] %s65
      %71 = dma.hbm_to_vmem [thread:$0]  %s64, 256, %s66, [#allocation9], 128, 128, 8
    $region17: #{tpu_custom_call.1} parent=1 // pred_fallthru
      _
    // Predicated region
    $region18: #{tpu_custom_call.1} parent=1 // pred_check
      _
    $region19: #{tpu_custom_call.1} parent=1 // pred_check_branch
      %73 = sbr.rel (0) target = $region21
    $region20: #{tpu_custom_call.1} parent=1 // pred_region
      %75 = vsyncadd [#allocation9], 0
      %s76 = sshll.u32 %s4, 4
      %s77 = int_to_ptr.hbm [resolvable:$true] %s76
      %s78 = sshll.u32 [#allocation10], 4
      %s79 = int_to_ptr.vmem [resolvable:$true] %s78
      %84 = dma.hbm_to_vmem [thread:$0]  %s77, 512, %s79, [#allocation9], 128, 128, 8
    $region21: #{tpu_custom_call.1} parent=1 // pred_fallthru
      _
    // Predicated region
    $region22: #{tpu_custom_call.1} parent=1 // pred_check
      _
    $region23: #{tpu_custom_call.1} parent=1 // pred_check_branch
      %86 = sbr.rel (0) target = $region25
    $region24: #{tpu_custom_call.1} parent=1 // pred_region
      %88 = vsyncadd [#allocation12], 0
      %s89 = sshll.u32 %s5, 4
      %s90 = int_to_ptr.hbm [resolvable:$true] %s89
      %s91 = sshll.u32 [#allocation11], 4
      %s92 = int_to_ptr.vmem [resolvable:$true] %s91
      %97 = dma.hbm_to_vmem [thread:$0]  %s90, 512, %s92, [#allocation12], 128, 128, 8
    $region25: #{tpu_custom_call.1} parent=1 // pred_fallthru
      _
    // Predicated region
    $region26: #{tpu_custom_call.1} parent=1 // pred_check
      _
    $region27: #{tpu_custom_call.1} parent=1 // pred_check_branch
      %99 = sbr.rel (0) target = $region29
    $region28: #{tpu_custom_call.1} parent=1 // pred_region
      %101 = vsyncadd [#allocation12], 0
      %s102 = sshll.u32 %s6, 4
      %s103 = int_to_ptr.hbm [resolvable:$true] %s102
      %s104 = sshll.u32 [#allocation13], 4
      %s105 = int_to_ptr.vmem [resolvable:$true] %s104
      %110 = dma.hbm_to_vmem [thread:$0]  %s103, 512, %s105, [#allocation12], 128, 128, 8
    $region29: #{tpu_custom_call.1} parent=1 // pred_fallthru
      _
    // Predicated region
    $region30: #{tpu_custom_call.1} parent=1 // pred_check
      _
    $region31: #{tpu_custom_call.1} parent=1 // pred_check_branch
      %112 = sbr.rel (0) target = $region33
    $region32: #{tpu_custom_call.1} parent=1 // pred_region
      %114 = vsyncadd [#allocation15], 0
      %s115 = sshll.u32 %s7, 4
      %s116 = int_to_ptr.hbm [resolvable:$true] %s115
      %s117 = sshll.u32 [#allocation14], 4
      %s118 = int_to_ptr.vmem [resolvable:$true] %s117
      %123 = dma.hbm_to_vmem [thread:$0]  %s116, 512, %s118, [#allocation15], 128, 128, 8
    $region33: #{tpu_custom_call.1} parent=1 // pred_fallthru
      _
    // Predicated region
    $region34: #{tpu_custom_call.1} parent=1 // pred_check
      _
    $region35: #{tpu_custom_call.1} parent=1 // pred_check_branch
      %125 = sbr.rel (0) target = $region37
    $region36: #{tpu_custom_call.1} parent=1 // pred_region
      _
    $region37: #{tpu_custom_call.1} parent=1 // pred_fallthru
      _
    // Predicated region
    $region38: #{tpu_custom_call.1} parent=1 // pred_check
      _
    $region39: #{tpu_custom_call.1} parent=1 // pred_check_branch
      %127 = sbr.rel (0) target = $region41
    $region40: #{tpu_custom_call.1} parent=1 // pred_region
      %129 = dma.done [#allocation3], 256
    $region41: #{tpu_custom_call.1} parent=1 // pred_fallthru
      _
    // Predicated region
    $region42: #{tpu_custom_call.1} parent=1 // pred_check
      _
    $region43: #{tpu_custom_call.1} parent=1 // pred_check_branch
      %131 = sbr.rel (0) target = $region45
    $region44: #{tpu_custom_call.1} parent=1 // pred_region
      %133 = dma.done [#allocation6], 256
    $region45: #{tpu_custom_call.1} parent=1 // pred_fallthru
      _
    // Predicated region
    $region46: #{tpu_custom_call.1} parent=1 // pred_check
      _
    $region47: #{tpu_custom_call.1} parent=1 // pred_check_branch
      %135 = sbr.rel (0) target = $region49
    $region48: #{tpu_custom_call.1} parent=1 // pred_region
      %137 = dma.done [#allocation6], 256
    $region49: #{tpu_custom_call.1} parent=1 // pred_fallthru
      _
    // Predicated region
    $region50: #{tpu_custom_call.1} parent=1 // pred_check
      _
    $region51: #{tpu_custom_call.1} parent=1 // pred_check_branch
      %139 = sbr.rel (0) target = $region53
    $region52: #{tpu_custom_call.1} parent=1 // pred_region
      %141 = dma.done [#allocation9], 256
    $region53: #{tpu_custom_call.1} parent=1 // pred_fallthru
      _
    // Predicated region
    $region54: #{tpu_custom_call.1} parent=1 // pred_check
      _
    $region55: #{tpu_custom_call.1} parent=1 // pred_check_branch
      %143 = sbr.rel (0) target = $region57
    $region56: #{tpu_custom_call.1} parent=1 // pred_region
      %145 = dma.done [#allocation9], 512
    $region57: #{tpu_custom_call.1} parent=1 // pred_fallthru
      _
    // Predicated region
    $region58: #{tpu_custom_call.1} parent=1 // pred_check
      _
    $region59: #{tpu_custom_call.1} parent=1 // pred_check_branch
      %147 = sbr.rel (0) target = $region61
    $region60: #{tpu_custom_call.1} parent=1 // pred_region
      %149 = dma.done [#allocation12], 512
    $region61: #{tpu_custom_call.1} parent=1 // pred_fallthru
      _
    // Predicated region
    $region62: #{tpu_custom_call.1} parent=1 // pred_check
      _
    $region63: #{tpu_custom_call.1} parent=1 // pred_check_branch
      %151 = sbr.rel (0) target = $region65
    $region64: #{tpu_custom_call.1} parent=1 // pred_region
      %153 = dma.done [#allocation12], 512
    $region65: #{tpu_custom_call.1} parent=1 // pred_fallthru
      _
    // Predicated region
    $region66: #{tpu_custom_call.1} parent=1 // pred_check
      _
    $region67: #{tpu_custom_call.1} parent=1 // pred_check_branch
      %155 = sbr.rel (0) target = $region69
    $region68: #{tpu_custom_call.1} parent=1 // pred_region
      %157 = dma.done [#allocation15], 512
    $region69: #{tpu_custom_call.1} parent=1 // pred_fallthru
      _
    %v158 = vld [vmem:[#allocation8] sm:$0xff]
    %v159 = vld [vmem:[#allocation8 + $0x8] sm:$0xff]
    %v160 = vld [vmem:[#allocation7] sm:$0xff]
    %v161 = vld [vmem:[#allocation7 + $0x8] sm:$0xff]
    %v162 = vld [vmem:[#allocation5] sm:$0xff]
    %v163 = vld [vmem:[#allocation5 + $0x8] sm:$0xff]
    %v164 = vld [vmem:[#allocation13] sm:$0xff]
    %v165 = vld [vmem:[#allocation13 + $0x8] sm:$0xff]
    %v166 = vld [vmem:[#allocation13 + $0x10] sm:$0xff]
    %v167 = vld [vmem:[#allocation13 + $0x18] sm:$0xff]
    %vm168 = vcmask 261120
    %v170 = vsel %vm168, %v158, 0
    %v173 = vsel %vm168, %v159, 0
    %175 = vmatpush.msra.mxu0 0.0
    %176 = vmatpush.msra.mxu0 0.0
    %177 = vmatpush.msra.mxu0 0.0
    %178 = vmatpush.msra.mxu0 0.0
    %179 = vmatpush.msra.mxu0 0.0
    %180 = vmatpush.msra.mxu0 0.0
    %181 = vmatpush.msra.mxu0 0.0
    %182 = vmatpush.msra.mxu0 0.0
    %183 = vmatpush.msra.mxu0 0.0
    %184 = vmatpush.msra.mxu0 0.0
    %185 = vmatpush.msra.mxu0 0.0
    %186 = vmatpush.msra.mxu0 0.0
    %187 = vmatpush.msra.mxu0 %v167
    %188 = vmatpush.msra.mxu0 %v166
    %189 = vmatpush.msra.mxu0 %v165
    %190 = vmatpush.msra.mxu0 %v164
    %191 = vmatmul.f32.gmra.mxu0 %v170
    %v192 = vpop.f32.mrf.mxu0
    %v193 = vadd.f32 0.0, %v192
    %194 = vmatmul.f32.gmra.mxu0 %v173
    %v195 = vpop.f32.mrf.mxu0
    %v196 = vadd.f32 0.0, %v195
    %197 = vdwg.mxu0
    %v198 = vld [vmem:[#allocation11] sm:$0xff]
    %v199 = vld [vmem:[#allocation11 + $0x8] sm:$0xff]
    %v200 = vld [vmem:[#allocation11 + $0x10] sm:$0xff]
    %v201 = vld [vmem:[#allocation11 + $0x18] sm:$0xff]
    %v203 = vsel %vm168, %v160, 0
    %v206 = vsel %vm168, %v161, 0
    %208 = vmatpush.msra.mxu0 0.0
    %209 = vmatpush.msra.mxu0 0.0
    %210 = vmatpush.msra.mxu0 0.0
    %211 = vmatpush.msra.mxu0 0.0
    %212 = vmatpush.msra.mxu0 0.0
    %213 = vmatpush.msra.mxu0 0.0
    %214 = vmatpush.msra.mxu0 0.0
    %215 = vmatpush.msra.mxu0 0.0
    %216 = vmatpush.msra.mxu0 0.0
    %217 = vmatpush.msra.mxu0 0.0
    %218 = vmatpush.msra.mxu0 0.0
    %219 = vmatpush.msra.mxu0 0.0
    %220 = vmatpush.msra.mxu0 %v201
    %221 = vmatpush.msra.mxu0 %v200
    %222 = vmatpush.msra.mxu0 %v199
    %223 = vmatpush.msra.mxu0 %v198
    %224 = vmatmul.f32.gmra.mxu0 %v203
    %v225 = vpop.f32.mrf.mxu0
    %v226 = vadd.f32 0.0, %v225
    %227 = vmatmul.f32.gmra.mxu0 %v206
    %v228 = vpop.f32.mrf.mxu0
    %v229 = vadd.f32 0.0, %v228
    %230 = vdwg.mxu0
    %v231 = vld [vmem:[#allocation10] sm:$0xff]
    %v232 = vld [vmem:[#allocation10 + $0x8] sm:$0xff]
    %v233 = vld [vmem:[#allocation10 + $0x10] sm:$0xff]
    %v234 = vld [vmem:[#allocation10 + $0x18] sm:$0xff]
    %v236 = vsel %vm168, %v162, 0
    %v239 = vsel %vm168, %v163, 0
    %241 = vmatpush.msra.mxu0 0.0
    %242 = vmatpush.msra.mxu0 0.0
    %243 = vmatpush.msra.mxu0 0.0
    %244 = vmatpush.msra.mxu0 0.0
    %245 = vmatpush.msra.mxu0 0.0
    %246 = vmatpush.msra.mxu0 0.0
    %247 = vmatpush.msra.mxu0 0.0
    %248 = vmatpush.msra.mxu0 0.0
    %249 = vmatpush.msra.mxu0 0.0
    %250 = vmatpush.msra.mxu0 0.0
    %251 = vmatpush.msra.mxu0 0.0
    %252 = vmatpush.msra.mxu0 0.0
    %253 = vmatpush.msra.mxu0 %v234
    %254 = vmatpush.msra.mxu0 %v233
    %255 = vmatpush.msra.mxu0 %v232
    %256 = vmatpush.msra.mxu0 %v231
    %257 = vmatmul.f32.gmra.mxu0 %v236
    %v258 = vpop.f32.mrf.mxu0
    %v259 = vadd.f32 0.0, %v258
    %260 = vmatmul.f32.gmra.mxu0 %v239
    %v261 = vpop.f32.mrf.mxu0
    %v262 = vadd.f32 0.0, %v261
    %263 = vdwg.mxu0
    %v264 = vld [vmem:[#allocation2] sm:$0xff]
    %v265 = vld [vmem:[#allocation2 + $0x8] sm:$0xff]
    %vm266 = vcmask 130048
    %v268 = vsel %vm266, %v193, 0
    %v271 = vsel %vm266, %v226, 0
    %273 = vmatpush.xpose.msra.mxu0 0.0
    %274 = vmatpush.xpose.msra.mxu0 0.0
    %275 = vmatpush.xpose.msra.mxu0 0.0
    %276 = vmatpush.xpose.msra.mxu0 0.0
    %277 = vmatpush.xpose.msra.mxu0 0.0
    %278 = vmatpush.xpose.msra.mxu0 0.0
    %279 = vmatpush.xpose.msra.mxu0 0.0
    %280 = vmatpush.xpose.msra.mxu0 0.0
    %281 = vmatpush.xpose.msra.mxu0 0.0
    %282 = vmatpush.xpose.msra.mxu0 0.0
    %283 = vmatpush.xpose.msra.mxu0 0.0
    %284 = vmatpush.xpose.msra.mxu0 0.0
    %285 = vmatpush.xpose.msra.mxu0 0.0
    %286 = vmatpush.xpose.msra.mxu0 0.0
    %287 = vmatpush.xpose.msra.mxu0 0.0
    %288 = vmatpush.xpose.msra.mxu0 %v271
    %289 = vmatmul.f32.gmra.mxu0 %v268
    %v290 = vpop.f32.mrf.mxu0
    %v291 = vadd.f32 0.0, %v290
    %292 = vdwg.mxu0
    %v294 = vsel %vm266, %v196, 0
    %v297 = vsel %vm266, %v229, 0
    %299 = vmatpush.xpose.msra.mxu0 0.0
    %300 = vmatpush.xpose.msra.mxu0 0.0
    %301 = vmatpush.xpose.msra.mxu0 0.0
    %302 = vmatpush.xpose.msra.mxu0 0.0
    %303 = vmatpush.xpose.msra.mxu0 0.0
    %304 = vmatpush.xpose.msra.mxu0 0.0
    %305 = vmatpush.xpose.msra.mxu0 0.0
    %306 = vmatpush.xpose.msra.mxu0 0.0
    %307 = vmatpush.xpose.msra.mxu0 0.0
    %308 = vmatpush.xpose.msra.mxu0 0.0
    %309 = vmatpush.xpose.msra.mxu0 0.0
    %310 = vmatpush.xpose.msra.mxu0 0.0
    %311 = vmatpush.xpose.msra.mxu0 0.0
    %312 = vmatpush.xpose.msra.mxu0 0.0
    %313 = vmatpush.xpose.msra.mxu0 0.0
    %314 = vmatpush.xpose.msra.mxu0 %v297
    %315 = vmatmul.f32.gmra.mxu0 %v294
    %v316 = vpop.f32.mrf.mxu0
    %v317 = vadd.f32 0.0, %v316
    %318 = vdwg.mxu0
    %vm319 = vcmp.eq.f32.partialorder %v264, 0.0
    %vm320 = vcmp.eq.f32.partialorder %v265, 0.0
    %v321 = vsel %vm319, -1.767767e+19, %v291
    %v322 = vsel %vm320, -1.767767e+19, %v317
    %vm323 = vcmask 64512
    %v324 = vsel %vm323, %v321, -inf
    %325 = vmax.xlane.f32.xlu0 %v324
    %v326 = vpop.xlane.xlu0 %325
    %v327 = vsel %vm323, %v322, -inf
    %328 = vmax.xlane.f32.xlu0 %v327
    %v329 = vpop.xlane.xlu0 %328
    %v330 = vsub.f32 %v321, %v326
    %v331 = vsub.f32 %v322, %v329
    %v332 = vmul.f32 %v330, 1.442695
    %v333 = vpow.pop %v332
    %v334 = vmul.f32 %v331, 1.442695
    %v335 = vpow.pop %v334
    %v336 = vsel %vm323, %v333, 0.0
    %337 = vadd.xlane.f32.xlu0 %v336
    %v338 = vpop.xlane.xlu0 %337
    %v339 = vsel %vm323, %v335, 0.0
    %340 = vadd.xlane.f32.xlu0 %v339
    %v341 = vpop.xlane.xlu0 %340
    %v342 = vrcp.pop %v338
    %v343 = vmul.f32 %v338, %v342
    %v344 = vsub.f32 1.0, %v343
    %v345 = vmul.f32 %v342, %v344
    %v346 = vadd.f32 %v342, %v345
    %vm347 = vweird.f32 %v338
    %vm348 = vweird.f32 %v342
    %vm349 = vmor %vm347, %vm348
    %v350 = vsel %vm349, %v342, %v346
    %v351 = vand.u32 2147483647, %v338
    %vm352 = vcmp.eq.f32.partialorder %v351, 8.507059e+37
    %v353 = vand.u32 %v338, 2147483648
    %v354 = vor.u32 1.1754944e-38, %v353
    %v355 = vsel %vm352, %v354, %v350
    %v356 = vrcp.pop %v341
    %v357 = vmul.f32 %v341, %v356
    %v358 = vsub.f32 1.0, %v357
    %v359 = vmul.f32 %v356, %v358
    %v360 = vadd.f32 %v356, %v359
    %vm361 = vweird.f32 %v341
    %vm362 = vweird.f32 %v356
    %vm363 = vmor %vm361, %vm362
    %v364 = vsel %vm363, %v356, %v360
    %v365 = vand.u32 2147483647, %v341
    %vm366 = vcmp.eq.f32.partialorder %v365, 8.507059e+37
    %v367 = vand.u32 %v341, 2147483648
    %v368 = vor.u32 1.1754944e-38, %v367
    %v369 = vsel %vm366, %v368, %v364
    %v370 = vmul.f32 %v333, %v355
    %v371 = vmul.f32 %v335, %v369
    %v373 = vsel %vm323, %v370, 0
    %375 = vmatpush.msra.mxu0 0.0
    %376 = vmatpush.msra.mxu0 0.0
    %377 = vmatpush.msra.mxu0 0.0
    %378 = vmatpush.msra.mxu0 0.0
    %379 = vmatpush.msra.mxu0 0.0
    %380 = vmatpush.msra.mxu0 0.0
    %381 = vmatpush.msra.mxu0 0.0
    %382 = vmatpush.msra.mxu0 0.0
    %383 = vmatpush.msra.mxu0 0.0
    %384 = vmatpush.msra.mxu0 0.0
    %385 = vmatpush.msra.mxu0 0.0
    %386 = vmatpush.msra.mxu0 0.0
    %387 = vmatpush.msra.mxu0 0.0
    %388 = vmatpush.msra.mxu0 0.0
    %389 = vmatpush.msra.mxu0 0.0
    %390 = vmatpush.msra.mxu0 %v259
    %391 = vmatmul.f32.gmra.mxu0 %v373
    %v392 = vpop.f32.mrf.mxu0
    %v393 = vadd.f32 0.0, %v392
    %394 = vdwg.mxu0
    %v396 = vsel %vm323, %v371, 0
    %398 = vmatpush.msra.mxu0 0.0
    %399 = vmatpush.msra.mxu0 0.0
    %400 = vmatpush.msra.mxu0 0.0
    %401 = vmatpush.msra.mxu0 0.0
    %402 = vmatpush.msra.mxu0 0.0
    %403 = vmatpush.msra.mxu0 0.0
    %404 = vmatpush.msra.mxu0 0.0
    %405 = vmatpush.msra.mxu0 0.0
    %406 = vmatpush.msra.mxu0 0.0
    %407 = vmatpush.msra.mxu0 0.0
    %408 = vmatpush.msra.mxu0 0.0
    %409 = vmatpush.msra.mxu0 0.0
    %410 = vmatpush.msra.mxu0 0.0
    %411 = vmatpush.msra.mxu0 0.0
    %412 = vmatpush.msra.mxu0 0.0
    %413 = vmatpush.msra.mxu0 %v262
    %414 = vmatmul.f32.gmra.mxu0 %v396
    %v415 = vpop.f32.mrf.mxu0
    %v416 = vadd.f32 0.0, %v415
    %417 = vdwg.mxu0
    %v418 = vld [vmem:[#allocation14] sm:$0xff]
    %v419 = vld [vmem:[#allocation14 + $0x8] sm:$0xff]
    %420 = vrot.lane.b32.xlu0 %v193, 112
    %v421 = vpop.permute.xlu0 %420
    %422 = vrot.lane.b32.xlu0 %v226, 112
    %v423 = vpop.permute.xlu0 %422
    %v424 = vsel %vm266, %v421, 0
    %v426 = vsel %vm266, %v423, 0
    %428 = vmatpush.xpose.msra.mxu0 0.0
    %429 = vmatpush.xpose.msra.mxu0 0.0
    %430 = vmatpush.xpose.msra.mxu0 0.0
    %431 = vmatpush.xpose.msra.mxu0 0.0
    %432 = vmatpush.xpose.msra.mxu0 0.0
    %433 = vmatpush.xpose.msra.mxu0 0.0
    %434 = vmatpush.xpose.msra.mxu0 0.0
    %435 = vmatpush.xpose.msra.mxu0 0.0
    %436 = vmatpush.xpose.msra.mxu0 0.0
    %437 = vmatpush.xpose.msra.mxu0 0.0
    %438 = vmatpush.xpose.msra.mxu0 0.0
    %439 = vmatpush.xpose.msra.mxu0 0.0
    %440 = vmatpush.xpose.msra.mxu0 0.0
    %441 = vmatpush.xpose.msra.mxu0 0.0
    %442 = vmatpush.xpose.msra.mxu0 0.0
    %443 = vmatpush.xpose.msra.mxu0 %v426
    %444 = vmatmul.f32.gmra.mxu0 %v424
    %v445 = vpop.f32.mrf.mxu0
    %v446 = vadd.f32 0.0, %v445
    %447 = vdwg.mxu0
    %448 = vrot.lane.b32.xlu0 %v196, 112
    %v449 = vpop.permute.xlu0 %448
    %450 = vrot.lane.b32.xlu0 %v229, 112
    %v451 = vpop.permute.xlu0 %450
    %v452 = vsel %vm266, %v449, 0
    %v454 = vsel %vm266, %v451, 0
    %456 = vmatpush.xpose.msra.mxu0 0.0
    %457 = vmatpush.xpose.msra.mxu0 0.0
    %458 = vmatpush.xpose.msra.mxu0 0.0
    %459 = vmatpush.xpose.msra.mxu0 0.0
    %460 = vmatpush.xpose.msra.mxu0 0.0
    %461 = vmatpush.xpose.msra.mxu0 0.0
    %462 = vmatpush.xpose.msra.mxu0 0.0
    %463 = vmatpush.xpose.msra.mxu0 0.0
    %464 = vmatpush.xpose.msra.mxu0 0.0
    %465 = vmatpush.xpose.msra.mxu0 0.0
    %466 = vmatpush.xpose.msra.mxu0 0.0
    %467 = vmatpush.xpose.msra.mxu0 0.0
    %468 = vmatpush.xpose.msra.mxu0 0.0
    %469 = vmatpush.xpose.msra.mxu0 0.0
    %470 = vmatpush.xpose.msra.mxu0 0.0
    %471 = vmatpush.xpose.msra.mxu0 %v454
    %472 = vmatmul.f32.gmra.mxu0 %v452
    %v473 = vpop.f32.mrf.mxu0
    %v474 = vadd.f32 0.0, %v473
    %475 = vdwg.mxu0
    %v476 = vsel %vm319, -1.767767e+19, %v446
    %v477 = vsel %vm320, -1.767767e+19, %v474
    %v478 = vsel %vm323, %v476, -inf
    %479 = vmax.xlane.f32.xlu0 %v478
    %v480 = vpop.xlane.xlu0 %479
    %v481 = vsel %vm323, %v477, -inf
    %482 = vmax.xlane.f32.xlu0 %v481
    %v483 = vpop.xlane.xlu0 %482
    %v484 = vsub.f32 %v476, %v480
    %v485 = vsub.f32 %v477, %v483
    %v486 = vmul.f32 %v484, 1.442695
    %v487 = vpow.pop %v486
    %v488 = vmul.f32 %v485, 1.442695
    %v489 = vpow.pop %v488
    %v490 = vsel %vm323, %v487, 0.0
    %491 = vadd.xlane.f32.xlu0 %v490
    %v492 = vpop.xlane.xlu0 %491
    %v493 = vsel %vm323, %v489, 0.0
    %494 = vadd.xlane.f32.xlu0 %v493
    %v495 = vpop.xlane.xlu0 %494
    %v496 = vrcp.pop %v492
    %v497 = vmul.f32 %v492, %v496
    %v498 = vsub.f32 1.0, %v497
    %v499 = vmul.f32 %v496, %v498
    %v500 = vadd.f32 %v496, %v499
    %vm501 = vweird.f32 %v492
    %vm502 = vweird.f32 %v496
    %vm503 = vmor %vm501, %vm502
    %v504 = vsel %vm503, %v496, %v500
    %v505 = vand.u32 2147483647, %v492
    %vm506 = vcmp.eq.f32.partialorder %v505, 8.507059e+37
    %v507 = vand.u32 %v492, 2147483648
    %v508 = vor.u32 1.1754944e-38, %v507
    %v509 = vsel %vm506, %v508, %v504
    %v510 = vrcp.pop %v495
    %v511 = vmul.f32 %v495, %v510
    %v512 = vsub.f32 1.0, %v511
    %v513 = vmul.f32 %v510, %v512
    %v514 = vadd.f32 %v510, %v513
    %vm515 = vweird.f32 %v495
    %vm516 = vweird.f32 %v510
    %vm517 = vmor %vm515, %vm516
    %v518 = vsel %vm517, %v510, %v514
    %v519 = vand.u32 2147483647, %v495
    %vm520 = vcmp.eq.f32.partialorder %v519, 8.507059e+37
    %v521 = vand.u32 %v495, 2147483648
    %v522 = vor.u32 1.1754944e-38, %v521
    %v523 = vsel %vm520, %v522, %v518
    %v524 = vmul.f32 %v487, %v509
    %v525 = vmul.f32 %v489, %v523
    %527 = vrot.lane.b32.xlu0 %v259, 112
    %v528 = vpop.permute.xlu0 %527
    %v531 = vsel %vm323, %v524, 0
    %533 = vmatpush.msra.mxu0 0.0
    %534 = vmatpush.msra.mxu0 0.0
    %535 = vmatpush.msra.mxu0 0.0
    %536 = vmatpush.msra.mxu0 0.0
    %537 = vmatpush.msra.mxu0 0.0
    %538 = vmatpush.msra.mxu0 0.0
    %539 = vmatpush.msra.mxu0 0.0
    %540 = vmatpush.msra.mxu0 0.0
    %541 = vmatpush.msra.mxu0 0.0
    %542 = vmatpush.msra.mxu0 0.0
    %543 = vmatpush.msra.mxu0 0.0
    %544 = vmatpush.msra.mxu0 0.0
    %545 = vmatpush.msra.mxu0 0.0
    %546 = vmatpush.msra.mxu0 0.0
    %547 = vmatpush.msra.mxu0 0.0
    %548 = vmatpush.msra.mxu0 %v528
    %549 = vmatmul.f32.gmra.mxu0 %v531
    %v550 = vpop.f32.mrf.mxu0
    %v551 = vadd.f32 0.0, %v550
    %552 = vdwg.mxu0
    %554 = vrot.lane.b32.xlu0 %v262, 112
    %v555 = vpop.permute.xlu0 %554
    %v558 = vsel %vm323, %v525, 0
    %560 = vmatpush.msra.mxu0 0.0
    %561 = vmatpush.msra.mxu0 0.0
    %562 = vmatpush.msra.mxu0 0.0
    %563 = vmatpush.msra.mxu0 0.0
    %564 = vmatpush.msra.mxu0 0.0
    %565 = vmatpush.msra.mxu0 0.0
    %566 = vmatpush.msra.mxu0 0.0
    %567 = vmatpush.msra.mxu0 0.0
    %568 = vmatpush.msra.mxu0 0.0
    %569 = vmatpush.msra.mxu0 0.0
    %570 = vmatpush.msra.mxu0 0.0
    %571 = vmatpush.msra.mxu0 0.0
    %572 = vmatpush.msra.mxu0 0.0
    %573 = vmatpush.msra.mxu0 0.0
    %574 = vmatpush.msra.mxu0 0.0
    %575 = vmatpush.msra.mxu0 %v555
    %576 = vmatmul.f32.gmra.mxu0 %v558
    %v577 = vpop.f32.mrf.mxu0
    %v578 = vadd.f32 0.0, %v577
    %579 = vdwg.mxu0
    %v580 = vld [vmem:[#allocation14 + $0x10] sm:$0xff]
    %v581 = vld [vmem:[#allocation14 + $0x18] sm:$0xff]
    %v583 = vsel %vm266, %v551, 0
    %v586 = vsel %vm266, %v578, 0
    %588 = vmatpush.msra.mxu0 0.0
    %589 = vmatpush.msra.mxu0 0.0
    %590 = vmatpush.msra.mxu0 0.0
    %591 = vmatpush.msra.mxu0 0.0
    %592 = vmatpush.msra.mxu0 0.0
    %593 = vmatpush.msra.mxu0 0.0
    %594 = vmatpush.msra.mxu0 0.0
    %595 = vmatpush.msra.mxu0 0.0
    %596 = vmatpush.msra.mxu0 0.0
    %597 = vmatpush.msra.mxu0 0.0
    %598 = vmatpush.msra.mxu0 0.0
    %599 = vmatpush.msra.mxu0 0.0
    %600 = vmatpush.msra.mxu0 0.0
    %601 = vmatpush.msra.mxu0 0.0
    %602 = vmatpush.msra.mxu0 %v581
    %603 = vmatpush.msra.mxu0 %v580
    %604 = vmatmul.f32.gmra.mxu0 %v583
    %v605 = vpop.f32.mrf.mxu0
    %v606 = vadd.f32 0.0, %v605
    %607 = vmatmul.f32.gmra.mxu0 %v586
    %v608 = vpop.f32.mrf.mxu0
    %v609 = vadd.f32 0.0, %v608
    %610 = vdwg.mxu0
    %v612 = vsel %vm266, %v393, 0
    %v615 = vsel %vm266, %v416, 0
    %617 = vmatpush.msra.mxu0 0.0
    %618 = vmatpush.msra.mxu0 0.0
    %619 = vmatpush.msra.mxu0 0.0
    %620 = vmatpush.msra.mxu0 0.0
    %621 = vmatpush.msra.mxu0 0.0
    %622 = vmatpush.msra.mxu0 0.0
    %623 = vmatpush.msra.mxu0 0.0
    %624 = vmatpush.msra.mxu0 0.0
    %625 = vmatpush.msra.mxu0 0.0
    %626 = vmatpush.msra.mxu0 0.0
    %627 = vmatpush.msra.mxu0 0.0
    %628 = vmatpush.msra.mxu0 0.0
    %629 = vmatpush.msra.mxu0 0.0
    %630 = vmatpush.msra.mxu0 0.0
    %631 = vmatpush.msra.mxu0 %v419
    %632 = vmatpush.msra.mxu0 %v418
    %633 = vmatmul.f32.gmra.mxu0 %v612
    %v634 = vpop.f32.mrf.mxu0
    %v635 = vadd.f32 %v606, %v634
    %636 = vmatmul.f32.gmra.mxu0 %v615
    %v637 = vpop.f32.mrf.mxu0
    %v638 = vadd.f32 %v609, %v637
    %639 = vdwg.mxu0
    %v640 = vld [vmem:[%s8] sm:$0x1]
    %v642 = vperm.slane %v640, 0
    %v644 = vadd.f32 %v635, %v642
    %v645 = vadd.f32 %v638, %v642
    %646 = vst.msk [vmem:[#allocation16] sm:$0xff] %vm168, %v644
    %647 = vst.msk [vmem:[#allocation16 + $0x8] sm:$0xff] %vm168, %v645
    // Predicated region
    $region70: #{tpu_custom_call.1} parent=1 // pred_check
      _
    $region71: #{tpu_custom_call.1} parent=1 // pred_check_branch
      %649 = sbr.rel (0) target = $region73
    $region72: #{tpu_custom_call.1} parent=1 // pred_region
      %651 = vsyncadd [#allocation4], 0
      %s652 = sshll.u32 [#allocation16], 4
      %s653 = int_to_ptr.vmem [resolvable:$true] %s652
      %s654 = sshll.u32 %s9, 4
      %s655 = int_to_ptr.hbm [resolvable:$true] %s654
      %660 = dma.vmem_to_hbm [thread:$0]  %s653, 256, %s655, [#allocation4], 128, 128, 8
    $region73: #{tpu_custom_call.1} parent=1 // pred_fallthru
      _
    // Predicated region
    $region74: #{tpu_custom_call.1} parent=1 // pred_check
      _
    $region75: #{tpu_custom_call.1} parent=1 // pred_check_branch
      %662 = sbr.rel (0) target = $region77
    $region76: #{tpu_custom_call.1} parent=1 // pred_region
      %664 = dma.done [#allocation4], 256
    $region77: #{tpu_custom_call.1} parent=1 // pred_fallthru
      _
    %665 = vsyncpa [#allocation3], 1
    %666 = vsyncpa [#allocation6], 1
    %667 = vsyncpa [#allocation9], 1
    %668 = vsyncpa [#allocation12], 1
    %669 = vsyncpa [#allocation15], 1
    %670 = vsyncpa [#allocation4], 1

</llo_original>
